<compile_context>
chip_gen: v6e
topology: v6e:2x2x1
jax: 0.10.0
libtpu: 0.0.40
codegen_flags: <defaults>
</compile_context>

<pallas_src>
import functools

import jax
import jax.numpy as jnp
from jax.experimental import pallas as pl
from jax.experimental.pallas import tpu as pltpu


def _round_up(v, m):
    return ((v + m - 1) // m) * m


def _siamfc_kernel(z_ref, x_ref, o_ref, *, hz, wz, wx, m_pad, out_scale):
    # z_ref: (Bb, HZ*WZ, C)   x_ref: (Bb, C, N_pad)   o_ref: (Bb, 1, M_pad)
    bb = z_ref.shape[0]

    def body(b, carry):
        z_b = z_ref[b]                                   # (HZ*WZ, C)
        x_b = x_ref[b]                                   # (C, N_pad)
        # Channel contraction on the MXU, f32 accumulation.
        q = jnp.dot(z_b, x_b,
                    preferred_element_type=jnp.float32)  # (HZ*WZ, N_pad)

        # Shift-accumulate the HZ*WZ exemplar taps:
        #   acc[m] = sum_{i,j} q[i*wz + j, m + i*wx + j]
        # Balanced tree sum keeps the f32 add dependency chain logarithmic.
        terms = []
        for i in range(hz):
            for j in range(wz):
                k = i * wz + j
                s = i * wx + j
                terms.append(q[k:k + 1, s:s + m_pad])
        while len(terms) > 1:
            nxt = [terms[t] + terms[t + 1]
                   for t in range(0, len(terms) - 1, 2)]
            if len(terms) % 2:
                nxt.append(terms[-1])
            terms = nxt

        out = (terms[0] * out_scale).astype(o_ref.dtype)  # (1, M_pad)
        o_ref[pl.ds(b, 1), :, :] = out.reshape(1, 1, m_pad)
        return carry

    jax.lax.fori_loop(0, bb, body, 0)


def siamfc_forward(z, x, out_scale=0.001, block_b=None):
    """Pallas implementation of SiamFC.forward(z, x) (nx must be k * nz)."""
    nz, c, hz, wz = z.shape
    nx, cx, hx, wx = x.shape
    assert c == cx and nx % nz == 0, "x batch must be a multiple of z batch"
    ho, wo = hx - hz + 1, wx - wz + 1

    kz = hz * wz                         # number of exemplar taps
    m_flat = ho * wx                     # flattened (row-strided) output length
    m_pad = _round_up(m_flat, 128)       # lane-dense output width
    max_shift = (hz - 1) * wx + (wz - 1)
    n_pad = _round_up(max(hx * wx, m_pad + max_shift), 128)

    # Lane-dense repack (pure XLA layout plumbing, outside the kernel):
    #   exemplar -> (NZ, HZ*WZ, C); search -> (NX, C, HX*WX zero-padded to N_pad)
    z_r = z.reshape(nz, c, kz).transpose(0, 2, 1)
    x_r = x.reshape(nx, c, hx * wx)
    x_r = jnp.pad(x_r, ((0, 0), (0, 0), (0, n_pad - hx * wx)))

    itemsize = jnp.dtype(x.dtype).itemsize
    if block_b is None:
        # Pick the largest batch block (<= 8, divides nz so the grouped
        # index_map stays block-aligned) whose double-buffered footprint
        # fits a conservative VMEM budget.
        per_b = 2 * (kz * c + c * n_pad + m_pad) * itemsize
        budget = 12 * 1024 * 1024
        block_b = 1
        for cand in range(min(nz, 8), 0, -1):
            if nz % cand == 0 and cand * per_b <= budget:
                block_b = cand
                break
    assert nz % block_b == 0 and nx % block_b == 0
    grid = (nx // block_b,)
    z_blocks = nz // block_b

    kernel = functools.partial(
        _siamfc_kernel, hz=hz, wz=wz, wx=wx, m_pad=m_pad, out_scale=out_scale)

    cost = pl.CostEstimate(
        flops=2 * nx * kz * c * n_pad + nx * kz * m_pad,
        transcendentals=0,
        bytes_accessed=(nx * kz * c + x_r.size + nx * m_pad) * itemsize)

    out_p = pl.pallas_call(
        kernel,
        out_shape=jax.ShapeDtypeStruct((nx, 1, m_pad), x.dtype),
        grid=grid,
        in_specs=[
            pl.BlockSpec((block_b, kz, c), lambda g: (g % z_blocks, 0, 0)),
            pl.BlockSpec((block_b, c, n_pad), lambda g: (g, 0, 0)),
        ],
        out_specs=pl.BlockSpec((block_b, 1, m_pad), lambda g: (g, 0, 0)),
        compiler_params=pltpu.CompilerParams(
            dimension_semantics=("parallel",)),
        cost_estimate=cost,
    )(z_r, x_r)

    # Un-pad / un-flatten outside the kernel (tiny arrays, layout plumbing).
    out = out_p[:, 0, :m_flat].reshape(nx, ho, wx)[:, :, :wo]
    return out[:, None, :, :]


def siamfc_reference(z, x, out_scale=0.001):
    """Plain-JAX mirror of the PyTorch forward (grouped conv trick)."""
    nz, c = z.shape[0], z.shape[1]
    nx, _, hx, wx = x.shape
    xr = x.reshape(-1, nz * c, hx, wx)
    out = jax.lax.conv_general_dilated(
        xr, z,
        window_strides=(1, 1),
        padding="VALID",
        dimension_numbers=("NCHW", "OIHW", "NCHW"),
        feature_group_count=nz)
    out = out.reshape(nx, -1, out.shape[-2], out.shape[-1])
    return out * out_scale


if __name__ == "__main__":
    # Small SiamFC-like shapes: exemplar 6x6, search 16x16, 4 channels, batch 2.
    key = jax.random.PRNGKey(0)
    key_z, key_x, key_z1 = jax.random.split(key, 3)
    z = jax.random.normal(key_z, (2, 4, 6, 6), dtype=jnp.float32)
    x = jax.random.normal(key_x, (2, 4, 16, 16), dtype=jnp.float32)

    # Standard case: nz == nx.
    out = jax.block_until_ready(siamfc_forward(z, x))
    ref = siamfc_reference(z, x)
    assert out.shape == (2, 1, 11, 11), out.shape
    assert jnp.allclose(out, ref, rtol=1e-4, atol=1e-6), (
        float(jnp.max(jnp.abs(out - ref))))

    # Grouped case: one exemplar shared across the search batch (nx = k * nz).
    z1 = jax.random.normal(key_z1, (1, 4, 6, 6), dtype=jnp.float32)
    out1 = jax.block_until_ready(siamfc_forward(z1, x))
    ref1 = siamfc_reference(z1, x)
    assert out1.shape == (2, 1, 11, 11), out1.shape
    assert jnp.allclose(out1, ref1, rtol=1e-4, atol=1e-6), (
        float(jnp.max(jnp.abs(out1 - ref1))))

    print("KERNEL_OK")
</pallas_src>

<mosaic_0001>
module attributes {stable_mosaic.version = 11 : i64} {
  func.func @_siamfc_kernel(%arg0: i32, %arg1: memref<2x36x4xf32, #tpu.memory_space<vmem>>, %arg2: memref<2x4x384xf32, #tpu.memory_space<vmem>>, %arg3: memref<2x1x256xf32, #tpu.memory_space<vmem>>) attributes {dimension_semantics = [#tpu.dimension_semantics<parallel>], iteration_bounds = array<i64: 1>, scalar_prefetch = 0 : i64, scratch_operands = 0 : i64, tpu.core_type = #tpu.core_type<tc>, window_params = [{transform_indices = @transform_0, window_bounds = array<i64: 2, 36, 4>}, {transform_indices = @transform_1, window_bounds = array<i64: 2, 4, 384>}, {transform_indices = @transform_2, window_bounds = array<i64: 2, 1, 256>}]} {
    %c0_i32 = arith.constant 0 : i32
    %c2_i32 = arith.constant 2 : i32
    %0 = arith.addi %c0_i32, %c2_i32 : i32
    %c1_i32 = arith.constant 1 : i32
    scf.for %arg4 = %c0_i32 to %0 step %c1_i32  : i32 {
      %1 = arith.index_cast %arg4 : i32 to index
      %c0 = arith.constant 0 : index
      %c0_1 = arith.constant 0 : index
      %2 = vector.load %arg1[%1, %c0, %c0_1] : memref<2x36x4xf32, #tpu.memory_space<vmem>>, vector<1x36x4xf32>
      %3 = vector.shape_cast %2 : vector<1x36x4xf32> to vector<36x4xf32>
      %4 = arith.index_cast %arg4 : i32 to index
      %c0_2 = arith.constant 0 : index
      %c0_3 = arith.constant 0 : index
      %5 = vector.load %arg2[%4, %c0_2, %c0_3] : memref<2x4x384xf32, #tpu.memory_space<vmem>>, vector<1x4x384xf32>
      %6 = vector.shape_cast %5 : vector<1x4x384xf32> to vector<4x384xf32>
      %cst = arith.constant dense<0.000000e+00> : vector<36x384xf32>
      %7 = tpu.matmul %3, %6, %cst {dimension_numbers = #tpu.dot_dimension_numbers<[1], [0], [0], [1], [0, 0, 1, 1], [], []>} : vector<36x4xf32>, vector<4x384xf32>, vector<36x384xf32> -> vector<36x384xf32>
      %8 = vector.extract_strided_slice %7 {offsets = [0, 0], sizes = [1, 256], strides = [1, 1]} : vector<36x384xf32> to vector<1x256xf32>
      %9 = vector.extract_strided_slice %7 {offsets = [1, 1], sizes = [1, 256], strides = [1, 1]} : vector<36x384xf32> to vector<1x256xf32>
      %10 = vector.extract_strided_slice %7 {offsets = [2, 2], sizes = [1, 256], strides = [1, 1]} : vector<36x384xf32> to vector<1x256xf32>
      %11 = vector.extract_strided_slice %7 {offsets = [3, 3], sizes = [1, 256], strides = [1, 1]} : vector<36x384xf32> to vector<1x256xf32>
      %12 = vector.extract_strided_slice %7 {offsets = [4, 4], sizes = [1, 256], strides = [1, 1]} : vector<36x384xf32> to vector<1x256xf32>
      %13 = vector.extract_strided_slice %7 {offsets = [5, 5], sizes = [1, 256], strides = [1, 1]} : vector<36x384xf32> to vector<1x256xf32>
      %14 = vector.extract_strided_slice %7 {offsets = [6, 16], sizes = [1, 256], strides = [1, 1]} : vector<36x384xf32> to vector<1x256xf32>
      %15 = vector.extract_strided_slice %7 {offsets = [7, 17], sizes = [1, 256], strides = [1, 1]} : vector<36x384xf32> to vector<1x256xf32>
      %16 = vector.extract_strided_slice %7 {offsets = [8, 18], sizes = [1, 256], strides = [1, 1]} : vector<36x384xf32> to vector<1x256xf32>
      %17 = vector.extract_strided_slice %7 {offsets = [9, 19], sizes = [1, 256], strides = [1, 1]} : vector<36x384xf32> to vector<1x256xf32>
      %18 = vector.extract_strided_slice %7 {offsets = [10, 20], sizes = [1, 256], strides = [1, 1]} : vector<36x384xf32> to vector<1x256xf32>
      %19 = vector.extract_strided_slice %7 {offsets = [11, 21], sizes = [1, 256], strides = [1, 1]} : vector<36x384xf32> to vector<1x256xf32>
      %20 = vector.extract_strided_slice %7 {offsets = [12, 32], sizes = [1, 256], strides = [1, 1]} : vector<36x384xf32> to vector<1x256xf32>
      %21 = vector.extract_strided_slice %7 {offsets = [13, 33], sizes = [1, 256], strides = [1, 1]} : vector<36x384xf32> to vector<1x256xf32>
      %22 = vector.extract_strided_slice %7 {offsets = [14, 34], sizes = [1, 256], strides = [1, 1]} : vector<36x384xf32> to vector<1x256xf32>
      %23 = vector.extract_strided_slice %7 {offsets = [15, 35], sizes = [1, 256], strides = [1, 1]} : vector<36x384xf32> to vector<1x256xf32>
      %24 = vector.extract_strided_slice %7 {offsets = [16, 36], sizes = [1, 256], strides = [1, 1]} : vector<36x384xf32> to vector<1x256xf32>
      %25 = vector.extract_strided_slice %7 {offsets = [17, 37], sizes = [1, 256], strides = [1, 1]} : vector<36x384xf32> to vector<1x256xf32>
      %26 = vector.extract_strided_slice %7 {offsets = [18, 48], sizes = [1, 256], strides = [1, 1]} : vector<36x384xf32> to vector<1x256xf32>
      %27 = vector.extract_strided_slice %7 {offsets = [19, 49], sizes = [1, 256], strides = [1, 1]} : vector<36x384xf32> to vector<1x256xf32>
      %28 = vector.extract_strided_slice %7 {offsets = [20, 50], sizes = [1, 256], strides = [1, 1]} : vector<36x384xf32> to vector<1x256xf32>
      %29 = vector.extract_strided_slice %7 {offsets = [21, 51], sizes = [1, 256], strides = [1, 1]} : vector<36x384xf32> to vector<1x256xf32>
      %30 = vector.extract_strided_slice %7 {offsets = [22, 52], sizes = [1, 256], strides = [1, 1]} : vector<36x384xf32> to vector<1x256xf32>
      %31 = vector.extract_strided_slice %7 {offsets = [23, 53], sizes = [1, 256], strides = [1, 1]} : vector<36x384xf32> to vector<1x256xf32>
      %32 = vector.extract_strided_slice %7 {offsets = [24, 64], sizes = [1, 256], strides = [1, 1]} : vector<36x384xf32> to vector<1x256xf32>
      %33 = vector.extract_strided_slice %7 {offsets = [25, 65], sizes = [1, 256], strides = [1, 1]} : vector<36x384xf32> to vector<1x256xf32>
      %34 = vector.extract_strided_slice %7 {offsets = [26, 66], sizes = [1, 256], strides = [1, 1]} : vector<36x384xf32> to vector<1x256xf32>
      %35 = vector.extract_strided_slice %7 {offsets = [27, 67], sizes = [1, 256], strides = [1, 1]} : vector<36x384xf32> to vector<1x256xf32>
      %36 = vector.extract_strided_slice %7 {offsets = [28, 68], sizes = [1, 256], strides = [1, 1]} : vector<36x384xf32> to vector<1x256xf32>
      %37 = vector.extract_strided_slice %7 {offsets = [29, 69], sizes = [1, 256], strides = [1, 1]} : vector<36x384xf32> to vector<1x256xf32>
      %38 = vector.extract_strided_slice %7 {offsets = [30, 80], sizes = [1, 256], strides = [1, 1]} : vector<36x384xf32> to vector<1x256xf32>
      %39 = vector.extract_strided_slice %7 {offsets = [31, 81], sizes = [1, 256], strides = [1, 1]} : vector<36x384xf32> to vector<1x256xf32>
      %40 = vector.extract_strided_slice %7 {offsets = [32, 82], sizes = [1, 256], strides = [1, 1]} : vector<36x384xf32> to vector<1x256xf32>
      %41 = vector.extract_strided_slice %7 {offsets = [33, 83], sizes = [1, 256], strides = [1, 1]} : vector<36x384xf32> to vector<1x256xf32>
      %42 = vector.extract_strided_slice %7 {offsets = [34, 84], sizes = [1, 256], strides = [1, 1]} : vector<36x384xf32> to vector<1x256xf32>
      %43 = vector.extract_strided_slice %7 {offsets = [35, 85], sizes = [1, 256], strides = [1, 1]} : vector<36x384xf32> to vector<1x256xf32>
      %44 = arith.addf %8, %9 : vector<1x256xf32>
      %45 = arith.addf %10, %11 : vector<1x256xf32>
      %46 = arith.addf %12, %13 : vector<1x256xf32>
      %47 = arith.addf %14, %15 : vector<1x256xf32>
      %48 = arith.addf %16, %17 : vector<1x256xf32>
      %49 = arith.addf %18, %19 : vector<1x256xf32>
      %50 = arith.addf %20, %21 : vector<1x256xf32>
      %51 = arith.addf %22, %23 : vector<1x256xf32>
      %52 = arith.addf %24, %25 : vector<1x256xf32>
      %53 = arith.addf %26, %27 : vector<1x256xf32>
      %54 = arith.addf %28, %29 : vector<1x256xf32>
      %55 = arith.addf %30, %31 : vector<1x256xf32>
      %56 = arith.addf %32, %33 : vector<1x256xf32>
      %57 = arith.addf %34, %35 : vector<1x256xf32>
      %58 = arith.addf %36, %37 : vector<1x256xf32>
      %59 = arith.addf %38, %39 : vector<1x256xf32>
      %60 = arith.addf %40, %41 : vector<1x256xf32>
      %61 = arith.addf %42, %43 : vector<1x256xf32>
      %62 = arith.addf %44, %45 : vector<1x256xf32>
      %63 = arith.addf %46, %47 : vector<1x256xf32>
      %64 = arith.addf %48, %49 : vector<1x256xf32>
      %65 = arith.addf %50, %51 : vector<1x256xf32>
      %66 = arith.addf %52, %53 : vector<1x256xf32>
      %67 = arith.addf %54, %55 : vector<1x256xf32>
      %68 = arith.addf %56, %57 : vector<1x256xf32>
      %69 = arith.addf %58, %59 : vector<1x256xf32>
      %70 = arith.addf %60, %61 : vector<1x256xf32>
      %71 = arith.addf %62, %63 : vector<1x256xf32>
      %72 = arith.addf %64, %65 : vector<1x256xf32>
      %73 = arith.addf %66, %67 : vector<1x256xf32>
      %74 = arith.addf %68, %69 : vector<1x256xf32>
      %75 = arith.addf %71, %72 : vector<1x256xf32>
      %76 = arith.addf %73, %74 : vector<1x256xf32>
      %77 = arith.addf %75, %76 : vector<1x256xf32>
      %78 = arith.addf %77, %70 : vector<1x256xf32>
      %cst_4 = arith.constant 1.000000e-03 : f32
      %79 = vector.broadcast %cst_4 : f32 to vector<1x256xf32>
      %80 = arith.mulf %78, %79 : vector<1x256xf32>
      %81 = vector.shape_cast %80 : vector<1x256xf32> to vector<1x1x256xf32>
      %82 = arith.index_cast %arg4 : i32 to index
      %c0_5 = arith.constant 0 : index
      %c0_6 = arith.constant 0 : index
      %83 = vector.load %arg3[%82, %c0_5, %c0_6] : memref<2x1x256xf32, #tpu.memory_space<vmem>>, vector<1x1x256xf32>
      tpu.vector_store %arg3[%82, %c0_5, %c0_6], %81 {strides = array<i32>} : memref<2x1x256xf32, #tpu.memory_space<vmem>>, vector<1x1x256xf32>,
    }
    %c2_i32_0 = arith.constant 2 : i32
    return
  }
  func.func @transform_0(%arg0: i32) -> (i32, i32, i32) {
    %c1_i32 = arith.constant 1 : i32
    %c0_i32 = arith.constant 0 : i32
    %0 = arith.cmpi eq, %c1_i32, %c0_i32 : i32
    %c1_i32_0 = arith.constant 1 : i32
    %1 = arith.select %0, %c1_i32_0, %c1_i32 : i32
    %2 = arith.remsi %arg0, %1 : i32
    %c0_i32_1 = arith.constant 0 : i32
    %3 = arith.cmpi ne, %2, %c0_i32_1 : i32
    %c0_i32_2 = arith.constant 0 : i32
    %4 = arith.cmpi slt, %2, %c0_i32_2 : i32
    %c0_i32_3 = arith.constant 0 : i32
    %5 = arith.cmpi slt, %1, %c0_i32_3 : i32
    %6 = arith.xori %4, %5 : i1
    %7 = arith.andi %6, %3 : i1
    %8 = arith.addi %2, %1 : i32
    %9 = arith.select %7, %8, %2 : i32
    %c0_i32_4 = arith.constant 0 : i32
    %c0_i32_5 = arith.constant 0 : i32
    %c0_i32_6 = arith.constant 0 : i32
    return %9, %c0_i32_4, %c0_i32_5 : i32, i32, i32
  }
  func.func @transform_1(%arg0: i32) -> (i32, i32, i32) {
    %c0_i32 = arith.constant 0 : i32
    %c0_i32_0 = arith.constant 0 : i32
    %c0_i32_1 = arith.constant 0 : i32
    return %arg0, %c0_i32, %c0_i32_0 : i32, i32, i32
  }
  func.func @transform_2(%arg0: i32) -> (i32, i32, i32) {
    %c0_i32 = arith.constant 0 : i32
    %c0_i32_0 = arith.constant 0 : i32
    %c0_i32_1 = arith.constant 0 : i32
    return %arg0, %c0_i32, %c0_i32_0 : i32, i32, i32
  }
}

</mosaic_0001>

<llo_original>
// kernel: tpu_custom_call.1
$region0: #{tpu_custom_call.1}
  #allocation0 [shape = 'u32[]', space=smem, size = 0x4, offset = 0x4, fixed_abs, tag = 'smem constant byte address 0x4 - core index']
  #allocation1 [shape = 'u32[144,128]{1,0:T(1,128)}', space=vmem, size = 0x12000, scoped, tag = 'internal scratch']
  %s0 = inlined_call_operand.vmem [shape: f32[2,36,4], index: 0, kind: input, shape index: {}]
  %s1 = inlined_call_operand.vmem [shape: f32[2,4,384], index: 1, kind: input, shape index: {}]
  %s2 = inlined_call_operand.hbm [shape: f32[2,1,256], index: 2, kind: output, shape index: {}]
  %s3 = sld [smem:[#allocation0]]
  $region25: #{tpu_custom_call.1} parent=0
    _
  %s5 = ssub.s32 1, %s3
  %s6 = scalar_select 0, %s5, %s3
  $region1: #{tpu_custom_call.1} parent=0
    #allocation2 [shape = 'u8[2048]{0}', space=vmem, size = 0x800, scoped, tag = 'output window, operand 0, single buffered']
    #allocation3 [shape = 's32[1]{0}', space=sflag, size = 0x4, scoped, tag = 'scoped memory for tpu_custom_call.1']
    %7 = vsyncpa [#allocation3], 0
    // Predicated region
    $region2: #{tpu_custom_call.1} parent=1 // pred_check
      _
    $region3: #{tpu_custom_call.1} parent=1 // pred_check_branch
      %9 = sbr.rel (0) target = $region5
    $region4: #{tpu_custom_call.1} parent=1 // pred_region
      _
    $region5: #{tpu_custom_call.1} parent=1 // pred_fallthru
      _
    // Predicated region
    $region6: #{tpu_custom_call.1} parent=1 // pred_check
      _
    $region7: #{tpu_custom_call.1} parent=1 // pred_check_branch
      %11 = sbr.rel (0) target = $region9
    $region8: #{tpu_custom_call.1} parent=1 // pred_region
      _
    $region9: #{tpu_custom_call.1} parent=1 // pred_fallthru
      _
    loop: start=0, step=1, limit=2
    $region10: #{tpu_custom_call.1} parent=1 // loop_pre_header
      _
    $region11: #{tpu_custom_call.1} parent=1 // loop_header
      %s13 = sphi 0, %s17
      %p14 = scmp.ge.s32.totalorder %s13, 2
    $region12: #{tpu_custom_call.1} parent=1 // loop_header_branch
      %16 = sbr.rel (%p14) target = $region16
    $region13: #{tpu_custom_call.1} parent=1 // loop_body
      %s18 = smul.u32 %s13, 40
      %s19 = scalar_lea.vmem %s0, %s18
      %v20 = vld [vmem:[%s19] sm:$0xff]
      %v21 = vld [vmem:[%s19 + $0x8] sm:$0xff]
      %v22 = vld [vmem:[%s19 + $0x10] sm:$0xff]
      %v23 = vld [vmem:[%s19 + $0x18] sm:$0xff]
      %v24 = vld [vmem:[%s19 + $0x20] sm:$0xf]
      %s25 = smul.u32 %s13, 3
      %s26 = smul.addr %s25, 4
      %s27 = scalar_lea.vmem %s1, %s26
      %v28 = vld [vmem:[%s27] sm:$0xff]
      %v29 = vld [vmem:[%s27 + $0x8] sm:$0xf]
      %v32 = vcombine.high %v28, %v28
      %vm33 = vcmask 31744
      %v35 = vsel %vm33, %v20, 0
      %v38 = vsel %vm33, %v21, 0
      %v41 = vsel %vm33, %v22, 0
      %v44 = vsel %vm33, %v23, 0
      %v47 = vsel %vm33, %v24, 0
      %vm49 = vcmask 1043456
      %v50 = vsel %vm49, %v28, 0
      %v52 = vsel %vm49, %v32, 0
      %v54 = vsel %vm49, %v29, 0
      %56 = vmatprep.subr.mxu0 0.0
      %57 = vmatpush1.msra.mxu0 0.0
      %58 = vmatprep.subr.mxu0 0.0
      %59 = vmatpush1.msra.mxu0 0.0
      %60 = vmatprep.subr.mxu0 0.0
      %61 = vmatpush1.msra.mxu0 0.0
      %62 = vmatprep.subr.mxu0 0.0
      %63 = vmatpush1.msra.mxu0 0.0
      %64 = vmatprep.subr.mxu0 0.0
      %65 = vmatpush1.msra.mxu0 0.0
      %66 = vmatprep.subr.mxu0 0.0
      %67 = vmatpush1.msra.mxu0 0.0
      %68 = vmatprep.subr.mxu0 0.0
      %69 = vmatpush1.msra.mxu0 0.0
      %70 = vmatprep.subr.mxu0 0.0
      %71 = vmatpush1.msra.mxu0 0.0
      %72 = vmatprep.subr.mxu0 0.0
      %73 = vmatpush1.msra.mxu0 0.0
      %74 = vmatprep.subr.mxu0 0.0
      %75 = vmatpush1.msra.mxu0 0.0
      %76 = vmatprep.subr.mxu0 0.0
      %77 = vmatpush1.msra.mxu0 0.0
      %78 = vmatprep.subr.mxu0 0.0
      %79 = vmatpush1.msra.mxu0 0.0
      %80 = vmatprep.subr.mxu0 0.0
      %81 = vmatpush1.msra.mxu0 0.0
      %82 = vmatprep.subr.mxu0 0.0
      %83 = vmatpush1.msra.mxu0 0.0
      %84 = vmatprep.subr.mxu0 0.0
      %85 = vmatpush1.msra.mxu0 0.0
      %86 = vmatprep.subr.mxu0 %v52
      %87 = vmatpush1.msra.mxu0 %v50
      %88 = vmatprep.subr.mxu0 0.0
      %89 = vmatpush2.msra.mxu0 0.0
      %90 = vmatprep.subr.mxu0 0.0
      %91 = vmatpush2.msra.mxu0 0.0
      %92 = vmatprep.subr.mxu0 0.0
      %93 = vmatpush2.msra.mxu0 0.0
      %94 = vmatprep.subr.mxu0 0.0
      %95 = vmatpush2.msra.mxu0 0.0
      %96 = vmatprep.subr.mxu0 0.0
      %97 = vmatpush2.msra.mxu0 0.0
      %98 = vmatprep.subr.mxu0 0.0
      %99 = vmatpush2.msra.mxu0 0.0
      %100 = vmatprep.subr.mxu0 0.0
      %101 = vmatpush2.msra.mxu0 0.0
      %102 = vmatprep.subr.mxu0 0.0
      %103 = vmatpush2.msra.mxu0 0.0
      %104 = vmatprep.subr.mxu0 0.0
      %105 = vmatpush2.msra.mxu0 0.0
      %106 = vmatprep.subr.mxu0 0.0
      %107 = vmatpush2.msra.mxu0 0.0
      %108 = vmatprep.subr.mxu0 0.0
      %109 = vmatpush2.msra.mxu0 0.0
      %110 = vmatprep.subr.mxu0 0.0
      %111 = vmatpush2.msra.mxu0 0.0
      %112 = vmatprep.subr.mxu0 0.0
      %113 = vmatpush2.msra.mxu0 0.0
      %114 = vmatprep.subr.mxu0 0.0
      %115 = vmatpush2.msra.mxu0 0.0
      %116 = vmatprep.subr.mxu0 0.0
      %117 = vmatpush2.msra.mxu0 0.0
      %118 = vmatprep.subr.mxu0 0.0
      %119 = vmatpush2.msra.mxu0 0.0
      %120 = vmatprep.mubr.f32.mxu0 0.0
      %121 = vmatmul.mubr.f32.gmra.mxu0 %v35
      %v122 = vpop.f32.mrf.mxu0
      %v123 = vadd.f32 0.0, %v122
      %v124 = vpop.f32.mrf.mxu0
      %v125 = vadd.f32 0.0, %v124
      %126 = vmatprep.mubr.f32.mxu0 0.0
      %127 = vmatmul.mubr.f32.gmra.mxu0 %v38
      %v128 = vpop.f32.mrf.mxu0
      %v129 = vadd.f32 0.0, %v128
      %v130 = vpop.f32.mrf.mxu0
      %v131 = vadd.f32 0.0, %v130
      %132 = vmatprep.mubr.f32.mxu0 0.0
      %133 = vmatmul.mubr.f32.gmra.mxu0 %v41
      %v134 = vpop.f32.mrf.mxu0
      %v135 = vadd.f32 0.0, %v134
      %v136 = vpop.f32.mrf.mxu0
      %v137 = vadd.f32 0.0, %v136
      %138 = vmatprep.mubr.f32.mxu0 0.0
      %139 = vmatmul.mubr.f32.gmra.mxu0 %v44
      %v140 = vpop.f32.mrf.mxu0
      %v141 = vadd.f32 0.0, %v140
      %v142 = vpop.f32.mrf.mxu0
      %v143 = vadd.f32 0.0, %v142
      %144 = vmatprep.mubr.f32.mxu0 0.0
      %145 = vmatmul.mubr.f32.gmra.mxu0 %v47
      %v146 = vpop.f32.mrf.mxu0
      %v147 = vadd.f32 0.0, %v146
      %v148 = vpop.f32.mrf.mxu0
      %v149 = vadd.f32 0.0, %v148
      %150 = vdwg.mxu0
      %151 = vmatprep.subr.mxu0 0.0
      %152 = vmatpush1.msra.mxu0 0.0
      %153 = vmatprep.subr.mxu0 0.0
      %154 = vmatpush1.msra.mxu0 0.0
      %155 = vmatprep.subr.mxu0 0.0
      %156 = vmatpush1.msra.mxu0 0.0
      %157 = vmatprep.subr.mxu0 0.0
      %158 = vmatpush1.msra.mxu0 0.0
      %159 = vmatprep.subr.mxu0 0.0
      %160 = vmatpush1.msra.mxu0 0.0
      %161 = vmatprep.subr.mxu0 0.0
      %162 = vmatpush1.msra.mxu0 0.0
      %163 = vmatprep.subr.mxu0 0.0
      %164 = vmatpush1.msra.mxu0 0.0
      %165 = vmatprep.subr.mxu0 0.0
      %166 = vmatpush1.msra.mxu0 0.0
      %167 = vmatprep.subr.mxu0 0.0
      %168 = vmatpush1.msra.mxu0 0.0
      %169 = vmatprep.subr.mxu0 0.0
      %170 = vmatpush1.msra.mxu0 0.0
      %171 = vmatprep.subr.mxu0 0.0
      %172 = vmatpush1.msra.mxu0 0.0
      %173 = vmatprep.subr.mxu0 0.0
      %174 = vmatpush1.msra.mxu0 0.0
      %175 = vmatprep.subr.mxu0 0.0
      %176 = vmatpush1.msra.mxu0 0.0
      %177 = vmatprep.subr.mxu0 0.0
      %178 = vmatpush1.msra.mxu0 0.0
      %179 = vmatprep.subr.mxu0 0.0
      %180 = vmatpush1.msra.mxu0 0.0
      %181 = vmatprep.subr.mxu0 0.0
      %182 = vmatpush1.msra.mxu0 %v54
      %183 = vmatprep.subr.mxu0 0.0
      %184 = vmatpush2.msra.mxu0 0.0
      %185 = vmatprep.subr.mxu0 0.0
      %186 = vmatpush2.msra.mxu0 0.0
      %187 = vmatprep.subr.mxu0 0.0
      %188 = vmatpush2.msra.mxu0 0.0
      %189 = vmatprep.subr.mxu0 0.0
      %190 = vmatpush2.msra.mxu0 0.0
      %191 = vmatprep.subr.mxu0 0.0
      %192 = vmatpush2.msra.mxu0 0.0
      %193 = vmatprep.subr.mxu0 0.0
      %194 = vmatpush2.msra.mxu0 0.0
      %195 = vmatprep.subr.mxu0 0.0
      %196 = vmatpush2.msra.mxu0 0.0
      %197 = vmatprep.subr.mxu0 0.0
      %198 = vmatpush2.msra.mxu0 0.0
      %199 = vmatprep.subr.mxu0 0.0
      %200 = vmatpush2.msra.mxu0 0.0
      %201 = vmatprep.subr.mxu0 0.0
      %202 = vmatpush2.msra.mxu0 0.0
      %203 = vmatprep.subr.mxu0 0.0
      %204 = vmatpush2.msra.mxu0 0.0
      %205 = vmatprep.subr.mxu0 0.0
      %206 = vmatpush2.msra.mxu0 0.0
      %207 = vmatprep.subr.mxu0 0.0
      %208 = vmatpush2.msra.mxu0 0.0
      %209 = vmatprep.subr.mxu0 0.0
      %210 = vmatpush2.msra.mxu0 0.0
      %211 = vmatprep.subr.mxu0 0.0
      %212 = vmatpush2.msra.mxu0 0.0
      %213 = vmatprep.subr.mxu0 0.0
      %214 = vmatpush2.msra.mxu0 0.0
      %215 = vmatprep.mubr.f32.mxu0 0.0
      %216 = vmatmul.mubr.f32.gmra.mxu0 %v35
      %v217 = vpop.f32.mrf.mxu0
      %v218 = vadd.f32 0.0, %v217
      %v219 = vpop.f32.mrf.mxu0
      %220 = vmatprep.mubr.f32.mxu0 0.0
      %221 = vmatmul.mubr.f32.gmra.mxu0 %v38
      %v222 = vpop.f32.mrf.mxu0
      %v223 = vadd.f32 0.0, %v222
      %v224 = vpop.f32.mrf.mxu0
      %225 = vmatprep.mubr.f32.mxu0 0.0
      %226 = vmatmul.mubr.f32.gmra.mxu0 %v41
      %v227 = vpop.f32.mrf.mxu0
      %v228 = vadd.f32 0.0, %v227
      %v229 = vpop.f32.mrf.mxu0
      %230 = vmatprep.mubr.f32.mxu0 0.0
      %231 = vmatmul.mubr.f32.gmra.mxu0 %v44
      %v232 = vpop.f32.mrf.mxu0
      %v233 = vadd.f32 0.0, %v232
      %v234 = vpop.f32.mrf.mxu0
      %235 = vmatprep.mubr.f32.mxu0 0.0
      %236 = vmatmul.mubr.f32.gmra.mxu0 %v47
      %v237 = vpop.f32.mrf.mxu0
      %v238 = vadd.f32 0.0, %v237
      %v239 = vpop.f32.mrf.mxu0
      %240 = vdwg.mxu0
      %v244 = vrot.slane %v123, 1
      %v245 = vrot.slane %v125, 1
      %v246 = vrot.slane %v218, 1
      %247 = vrot.lane.b32.xlu0 %v244, 127
      %v248 = vpop.permute.xlu0 %247
      %249 = vrot.lane.b32.xlu0 %v245, 127
      %v250 = vpop.permute.xlu0 %249
      %251 = vrot.lane.b32.xlu0 %v246, 127
      %v252 = vpop.permute.xlu0 %251
      %vm253 = vcmask 1039360
      %v254 = vsel %vm253, %v248, %v250
      %v255 = vsel %vm253, %v250, %v252
      %v258 = vadd.f32 %v123, %v254
      %v259 = vadd.f32 %v125, %v255
      %v261 = vadd.f32 %v218, %v252
      %v265 = vrot.slane %v129, 1
      %v266 = vrot.slane %v131, 1
      %v267 = vrot.slane %v223, 1
      %268 = vrot.lane.b32.xlu0 %v265, 127
      %v269 = vpop.permute.xlu0 %268
      %270 = vrot.lane.b32.xlu0 %v266, 127
      %v271 = vpop.permute.xlu0 %270
      %272 = vrot.lane.b32.xlu0 %v267, 127
      %v273 = vpop.permute.xlu0 %272
      %v274 = vsel %vm253, %v269, %v271
      %v275 = vsel %vm253, %v271, %v273
      %v279 = vadd.f32 %v129, %v274
      %v280 = vadd.f32 %v131, %v275
      %v281 = vadd.f32 %v223, %v273
      %v285 = vrot.slane %v135, 1
      %v286 = vrot.slane %v137, 1
      %v287 = vrot.slane %v228, 1
      %288 = vrot.lane.b32.xlu0 %v285, 127
      %v289 = vpop.permute.xlu0 %288
      %290 = vrot.lane.b32.xlu0 %v286, 127
      %v291 = vpop.permute.xlu0 %290
      %292 = vrot.lane.b32.xlu0 %v287, 127
      %v293 = vpop.permute.xlu0 %292
      %v294 = vsel %vm253, %v289, %v291
      %v295 = vsel %vm253, %v291, %v293
      %v299 = vadd.f32 %v135, %v294
      %v300 = vadd.f32 %v137, %v295
      %v301 = vadd.f32 %v228, %v293
      %v305 = vrot.slane %v141, 1
      %v306 = vrot.slane %v143, 1
      %v307 = vrot.slane %v233, 1
      %308 = vrot.lane.b32.xlu0 %v305, 127
      %v309 = vpop.permute.xlu0 %308
      %310 = vrot.lane.b32.xlu0 %v306, 127
      %v311 = vpop.permute.xlu0 %310
      %312 = vrot.lane.b32.xlu0 %v307, 127
      %v313 = vpop.permute.xlu0 %312
      %v314 = vsel %vm253, %v309, %v311
      %v315 = vsel %vm253, %v311, %v313
      %v319 = vadd.f32 %v141, %v314
      %v320 = vadd.f32 %v143, %v315
      %v321 = vadd.f32 %v233, %v313
      %v325 = vrot.slane %v147, 1
      %v326 = vrot.slane %v149, 1
      %v327 = vrot.slane %v238, 1
      %328 = vrot.lane.b32.xlu0 %v325, 127
      %v329 = vpop.permute.xlu0 %328
      %330 = vrot.lane.b32.xlu0 %v326, 127
      %v331 = vpop.permute.xlu0 %330
      %332 = vrot.lane.b32.xlu0 %v327, 127
      %v333 = vpop.permute.xlu0 %332
      %v334 = vsel %vm253, %v329, %v331
      %v335 = vsel %vm253, %v331, %v333
      %v339 = vadd.f32 %v147, %v334
      %v340 = vadd.f32 %v149, %v335
      %v341 = vadd.f32 %v238, %v333
      %v345 = vrot.slane %v258, 2
      %v346 = vrot.slane %v259, 2
      %v347 = vrot.slane %v261, 2
      %348 = vrot.lane.b32.xlu0 %v345, 126
      %v349 = vpop.permute.xlu0 %348
      %350 = vrot.lane.b32.xlu0 %v346, 126
      %v351 = vpop.permute.xlu0 %350
      %352 = vrot.lane.b32.xlu0 %v347, 126
      %v353 = vpop.permute.xlu0 %352
      %vm354 = vcmask 1031168
      %v355 = vsel %vm354, %v349, %v351
      %v356 = vsel %vm354, %v351, %v353
      %v359 = vadd.f32 %v258, %v355
      %v360 = vadd.f32 %v259, %v356
      %361 = vrot.lane.b32.xlu0 %v345, 116
      %v362 = vpop.permute.xlu0 %361
      %363 = vrot.lane.b32.xlu0 %v346, 116
      %v364 = vpop.permute.xlu0 %363
      %365 = vrot.lane.b32.xlu0 %v347, 116
      %v366 = vpop.permute.xlu0 %365
      %vm367 = vcmask 949248
      %v368 = vsel %vm367, %v362, %v364
      %v369 = vsel %vm367, %v364, %v366
      %v373 = vadd.f32 %v258, %v368
      %v374 = vadd.f32 %v259, %v369
      %v375 = vadd.f32 %v261, %v366
      %v379 = vrot.slane %v279, 2
      %v380 = vrot.slane %v280, 2
      %v381 = vrot.slane %v281, 2
      %382 = vrot.lane.b32.xlu0 %v379, 126
      %v383 = vpop.permute.xlu0 %382
      %384 = vrot.lane.b32.xlu0 %v380, 126
      %v385 = vpop.permute.xlu0 %384
      %386 = vrot.lane.b32.xlu0 %v381, 126
      %v387 = vpop.permute.xlu0 %386
      %v388 = vsel %vm354, %v383, %v385
      %v389 = vsel %vm354, %v385, %v387
      %v393 = vadd.f32 %v279, %v388
      %v394 = vadd.f32 %v280, %v389
      %v395 = vadd.f32 %v281, %v387
      %v399 = vrot.slane %v299, 2
      %v400 = vrot.slane %v300, 2
      %v401 = vrot.slane %v301, 2
      %402 = vrot.lane.b32.xlu0 %v399, 116
      %v403 = vpop.permute.xlu0 %402
      %404 = vrot.lane.b32.xlu0 %v400, 116
      %v405 = vpop.permute.xlu0 %404
      %406 = vrot.lane.b32.xlu0 %v401, 116
      %v407 = vpop.permute.xlu0 %406
      %v408 = vsel %vm367, %v403, %v405
      %v409 = vsel %vm367, %v405, %v407
      %v413 = vadd.f32 %v299, %v408
      %v414 = vadd.f32 %v300, %v409
      %v415 = vadd.f32 %v301, %v407
      %416 = vrot.lane.b32.xlu0 %v399, 126
      %v417 = vpop.permute.xlu0 %416
      %418 = vrot.lane.b32.xlu0 %v400, 126
      %v419 = vpop.permute.xlu0 %418
      %420 = vrot.lane.b32.xlu0 %v401, 126
      %v421 = vpop.permute.xlu0 %420
      %v422 = vsel %vm354, %v417, %v419
      %v423 = vsel %vm354, %v419, %v421
      %v427 = vadd.f32 %v299, %v422
      %v428 = vadd.f32 %v300, %v423
      %v429 = vadd.f32 %v301, %v421
      %v433 = vrot.slane %v319, 2
      %v434 = vrot.slane %v320, 2
      %v435 = vrot.slane %v321, 2
      %436 = vrot.lane.b32.xlu0 %v433, 126
      %v437 = vpop.permute.xlu0 %436
      %438 = vrot.lane.b32.xlu0 %v434, 126
      %v439 = vpop.permute.xlu0 %438
      %440 = vrot.lane.b32.xlu0 %v435, 126
      %v441 = vpop.permute.xlu0 %440
      %v442 = vsel %vm354, %v437, %v439
      %v443 = vsel %vm354, %v439, %v441
      %v447 = vadd.f32 %v319, %v442
      %v448 = vadd.f32 %v320, %v443
      %v449 = vadd.f32 %v321, %v441
      %450 = vrot.lane.b32.xlu0 %v433, 116
      %v451 = vpop.permute.xlu0 %450
      %452 = vrot.lane.b32.xlu0 %v434, 116
      %v453 = vpop.permute.xlu0 %452
      %454 = vrot.lane.b32.xlu0 %v435, 116
      %v455 = vpop.permute.xlu0 %454
      %v456 = vsel %vm367, %v451, %v453
      %v457 = vsel %vm367, %v453, %v455
      %v461 = vadd.f32 %v319, %v456
      %v462 = vadd.f32 %v320, %v457
      %v463 = vadd.f32 %v321, %v455
      %v467 = vrot.slane %v339, 2
      %v468 = vrot.slane %v340, 2
      %v469 = vrot.slane %v341, 2
      %470 = vrot.lane.b32.xlu0 %v467, 126
      %v471 = vpop.permute.xlu0 %470
      %472 = vrot.lane.b32.xlu0 %v468, 126
      %v473 = vpop.permute.xlu0 %472
      %474 = vrot.lane.b32.xlu0 %v469, 126
      %v475 = vpop.permute.xlu0 %474
      %v476 = vsel %vm354, %v471, %v473
      %v477 = vsel %vm354, %v473, %v475
      %v481 = vadd.f32 %v339, %v476
      %v482 = vadd.f32 %v340, %v477
      %v483 = vadd.f32 %v341, %v475
      %v487 = vrot.slane %v373, 4
      %v488 = vrot.slane %v374, 4
      %v489 = vrot.slane %v375, 4
      %490 = vrot.lane.b32.xlu0 %v487, 124
      %v491 = vpop.permute.xlu0 %490
      %492 = vrot.lane.b32.xlu0 %v488, 124
      %v493 = vpop.permute.xlu0 %492
      %494 = vrot.lane.b32.xlu0 %v489, 124
      %v495 = vpop.permute.xlu0 %494
      %vm496 = vcmask 1014784
      %v497 = vsel %vm496, %v491, %v493
      %v498 = vsel %vm496, %v493, %v495
      %v501 = vadd.f32 %v359, %v497
      %v502 = vadd.f32 %v360, %v498
      %v506 = vrot.slane %v393, 4
      %v507 = vrot.slane %v394, 4
      %v508 = vrot.slane %v395, 4
      %509 = vrot.lane.b32.xlu0 %v506, 114
      %v510 = vpop.permute.xlu0 %509
      %511 = vrot.lane.b32.xlu0 %v507, 114
      %v512 = vpop.permute.xlu0 %511
      %513 = vrot.lane.b32.xlu0 %v508, 114
      %v514 = vpop.permute.xlu0 %513
      %vm515 = vcmask 932864
      %v516 = vsel %vm515, %v510, %v512
      %v517 = vsel %vm515, %v512, %v514
      %v521 = vadd.f32 %v393, %v516
      %v522 = vadd.f32 %v394, %v517
      %v523 = vadd.f32 %v395, %v514
      %v527 = vrot.slane %v427, 4
      %v528 = vrot.slane %v428, 4
      %v529 = vrot.slane %v429, 4
      %530 = vrot.lane.b32.xlu0 %v527, 114
      %v531 = vpop.permute.xlu0 %530
      %532 = vrot.lane.b32.xlu0 %v528, 114
      %v533 = vpop.permute.xlu0 %532
      %534 = vrot.lane.b32.xlu0 %v529, 114
      %v535 = vpop.permute.xlu0 %534
      %v536 = vsel %vm515, %v531, %v533
      %v537 = vsel %vm515, %v533, %v535
      %v541 = vadd.f32 %v413, %v536
      %v542 = vadd.f32 %v414, %v537
      %v543 = vadd.f32 %v415, %v535
      %v547 = vrot.slane %v461, 4
      %v548 = vrot.slane %v462, 4
      %v549 = vrot.slane %v463, 4
      %550 = vrot.lane.b32.xlu0 %v547, 124
      %v551 = vpop.permute.xlu0 %550
      %552 = vrot.lane.b32.xlu0 %v548, 124
      %v553 = vpop.permute.xlu0 %552
      %554 = vrot.lane.b32.xlu0 %v549, 124
      %v555 = vpop.permute.xlu0 %554
      %v556 = vsel %vm496, %v551, %v553
      %v557 = vsel %vm496, %v553, %v555
      %v561 = vadd.f32 %v447, %v556
      %v562 = vadd.f32 %v448, %v557
      %v563 = vadd.f32 %v449, %v555
      %567 = vrot.lane.b32.xlu0 %v521, 110
      %v568 = vpop.permute.xlu0 %567
      %569 = vrot.lane.b32.xlu0 %v522, 110
      %v570 = vpop.permute.xlu0 %569
      %571 = vrot.lane.b32.xlu0 %v523, 110
      %v572 = vpop.permute.xlu0 %571
      %vm573 = vcmask 900096
      %v574 = vsel %vm573, %v568, %v570
      %v575 = vsel %vm573, %v570, %v572
      %v578 = vadd.f32 %v501, %v574
      %v579 = vadd.f32 %v502, %v575
      %583 = vrot.lane.b32.xlu0 %v561, 100
      %v584 = vpop.permute.xlu0 %583
      %585 = vrot.lane.b32.xlu0 %v562, 100
      %v586 = vpop.permute.xlu0 %585
      %587 = vrot.lane.b32.xlu0 %v563, 100
      %v588 = vpop.permute.xlu0 %587
      %vm589 = vcmask 818176
      %v590 = vsel %vm589, %v584, %v586
      %v591 = vsel %vm589, %v586, %v588
      %v595 = vadd.f32 %v541, %v590
      %v596 = vadd.f32 %v542, %v591
      %v597 = vadd.f32 %v543, %v588
      %601 = vrot.lane.b32.xlu0 %v595, 92
      %v602 = vpop.permute.xlu0 %601
      %603 = vrot.lane.b32.xlu0 %v596, 92
      %v604 = vpop.permute.xlu0 %603
      %605 = vrot.lane.b32.xlu0 %v597, 92
      %v606 = vpop.permute.xlu0 %605
      %vm607 = vcmask 752640
      %v608 = vsel %vm607, %v602, %v604
      %v609 = vsel %vm607, %v604, %v606
      %v612 = vadd.f32 %v578, %v608
      %v613 = vadd.f32 %v579, %v609
      %617 = vrot.lane.b32.xlu0 %v481, 46
      %v618 = vpop.permute.xlu0 %617
      %619 = vrot.lane.b32.xlu0 %v482, 46
      %v620 = vpop.permute.xlu0 %619
      %621 = vrot.lane.b32.xlu0 %v483, 46
      %v622 = vpop.permute.xlu0 %621
      %vm623 = vcmask 375808
      %v624 = vsel %vm623, %v618, %v620
      %v625 = vsel %vm623, %v620, %v622
      %v628 = vadd.f32 %v612, %v624
      %v629 = vadd.f32 %v613, %v625
      %v630 = vmul.f32 %v628, 0.001
      %v631 = vmul.f32 %v629, 0.001
      %v634 = vcombine.low %v630, %v631
      %v636 = vunpack.c.l.s4 1966171168
      %v637 = vunpack.c.0.s8 %v636
      %v638 = vlaneseq
      %v639 = vshrl.u32 %v638, 7
      %v640 = vsub.s32 %v637, %v639
      %v641 = vrot.slane %v634, %v640
      %v643 = vunpack.c.l.s4 1966171168
      %v644 = vunpack.c.0.s8 %v643
      %v645 = vlaneseq
      %v646 = vshrl.u32 %v645, 7
      %v647 = vsub.s32 %v644, %v646
      %v648 = vrot.slane %v641, %v647
      %s650 = smul.u32 %s13, 2
      %s651 = scalar_lea.vmem [#allocation2], %s650
      %v652 = vlaneseq
      %vm653 = vcmp.ge.s32.totalorder %v652, 0
      %vm654 = vcmp.lt.s32.totalorder %v652, 256
      %vm655 = vmand %vm653, %vm654
      %656 = vst.msk [vmem:[%s651] sm:$0x3] %vm655, %v648
    $region14: #{tpu_custom_call.1} parent=1 // loop_footer
      %s17 = sadd.s32 1, %s13
    $region15: #{tpu_custom_call.1} parent=1 // loop_footer_branch
      %12 = sbr.rel target = $region11
    $region16: #{tpu_custom_call.1} parent=1 // loop_exit
      _
    // Predicated region
    $region17: #{tpu_custom_call.1} parent=1 // pred_check
      _
    $region18: #{tpu_custom_call.1} parent=1 // pred_check_branch
      %658 = sbr.rel (0) target = $region20
    $region19: #{tpu_custom_call.1} parent=1 // pred_region
      %s660 = ssub.s32 64, 64
      %661 = vsyncadd [#allocation3], %s660
      %s662 = sshll.u32 [#allocation2], 4
      %s663 = int_to_ptr.vmem [resolvable:$true] %s662
      %668 = dma.vmem_to_hbm [thread:$0]  %s663, 64, %s2, [#allocation3], 32, 32, 2
    $region20: #{tpu_custom_call.1} parent=1 // pred_fallthru
      _
    // Predicated region
    $region21: #{tpu_custom_call.1} parent=1 // pred_check
      _
    $region22: #{tpu_custom_call.1} parent=1 // pred_check_branch
      %670 = sbr.rel (0) target = $region24
    $region23: #{tpu_custom_call.1} parent=1 // pred_region
      %671 = dma.done [#allocation3], 64
    $region24: #{tpu_custom_call.1} parent=1 // pred_fallthru
      _
    %672 = vsyncpa [#allocation3], 1

</llo_original>
